<compile_context>
chip_gen: v7x
topology: tpu7x:2x2x1
jax: 0.10.0
libtpu: 0.0.40
codegen_flags: <defaults>
</compile_context>

<pallas_src>
import functools

import jax
import jax.numpy as jnp
from jax.experimental import pallas as pl
from jax.experimental.pallas import tpu as pltpu

HIDDEN = 64            # all MLPs in TimingGCN use 64-wide hidden layers
TM_MLP = 2048          # row tile for the standalone MLP kernels
TM_CELL = 512          # row tile for the fused prop_cell kernel (8x row-stacked scratch)
VMEM_LIMIT = 64 * 1024 * 1024


def _round_up(x, m):
    return ((x + m - 1) // m) * m


def _row_tiling(nrows, tm_max):
    """Row tile: multiple of 8, <= tm_max; halved until the 1-D 'parallel' grid has
    >= 2 steps when possible so both v7x TensorCores get work."""
    tm = min(tm_max, max(8, (nrows // 8) * 8))
    while tm > 8 and pl.cdiv(nrows, tm) < 2:
        tm = max(8, _round_up(tm // 2, 8))
    return tm


def _pad_rows_min(x, min_rows=8):
    n = x.shape[0]
    if n >= min_rows:
        return x
    return jnp.zeros((min_rows,) + x.shape[1:], x.dtype).at[:n].set(x)


def _const_spec(arr):
    """Full-extent, grid-invariant BlockSpec (weights / biases resident in VMEM)."""
    nd = arr.ndim
    return pl.BlockSpec(arr.shape, lambda i, _nd=nd: (0,) * _nd)


def _leaky(h):
    # LeakyReLU(0.2): mul+max (2 VPU ops) instead of cmp+mul+select.
    return jnp.maximum(h, 0.2 * h)


# ----------------------------------------------------------------------------
# Shared in-kernel MLP tail:
#   [LeakyReLU(0.2) -> Linear] * nmid -> LeakyReLU(0.2) -> Linear
# Matmul inputs bf16, accumulation + bias + activation in f32.
# ----------------------------------------------------------------------------
def _mlp_tail(h, wm, bm, wl, bl, nmid):
    for l in range(nmid):
        h = _leaky(h)
        h = jnp.dot(h.astype(jnp.bfloat16), wm[l],
                    preferred_element_type=jnp.float32) + bm[l]
    h = _leaky(h)
    return jnp.dot(h.astype(jnp.bfloat16), wl[...],
                   preferred_element_type=jnp.float32) + bl[...]


# ----------------------------------------------------------------------------
# Standalone fused-MLP kernel (netprop and cellreduce).
# dout = out_nf (8) -> narrow masked stores; left as-is per review ("check, else leave").
# ----------------------------------------------------------------------------
def _mlp_kernel(x_ref, w0, b0, wm, bm, wl, bl, o_ref, *, nmid):
    h = jnp.dot(x_ref[...], w0[...], preferred_element_type=jnp.float32) + b0[...]
    o_ref[...] = _mlp_tail(h, wm, bm, wl, bl, nmid)


def run_mlp(x, p, tm_max=TM_MLP):
    nrows = x.shape[0]
    xk = _pad_rows_min(x.astype(jnp.bfloat16))
    rows, din = xk.shape
    dout = p["wlast"].shape[1]
    tm = _row_tiling(rows, tm_max)
    grid = pl.cdiv(rows, tm)
    w_args = (p["w0"], p["b0"], p["wmid"], p["bmid"], p["wlast"], p["blast"])
    out = pl.pallas_call(
        functools.partial(_mlp_kernel, nmid=p["nmid"]),
        out_shape=jax.ShapeDtypeStruct((rows, dout), jnp.float32),
        grid_spec=pltpu.PrefetchScalarGridSpec(
            num_scalar_prefetch=0,
            grid=(grid,),
            in_specs=[pl.BlockSpec((tm, din), lambda i: (i, 0))]
                     + [_const_spec(a) for a in w_args],
            out_specs=pl.BlockSpec((tm, dout), lambda i: (i, 0)),
        ),
        compiler_params=pltpu.CompilerParams(
            dimension_semantics=("parallel",),
            vmem_limit_bytes=VMEM_LIMIT),
    )(xk, *w_args)
    return out[:nrows]


# ----------------------------------------------------------------------------
# Fused prop_cell edge kernel.
#   h_both = xc @ [Wq0 | Wm0_xc]                  (one matmul, fused first layers)
#   hq     = lut_query mids + (last layer folded with attention-first-layer q part)
#   ax_h   = axes @ blockdiag(Wa0_axis)           (both LUTs in one matmul)
#   h0s[k*tm:(k+1)*tm] = hq[:, k*64:(k+1)*64] + ax_h[:, l*64:(l+1)*64]
#   batched attention mids + expanded last layers (ax-repeat / ay-tile)
#   pk[:, k*SS:(k+1)*SS] = (p_ax * p_ay * table_l)          (lane-dense VPU)
#   r_h    = pk @ Wr        (folds sum-over-SS-lanes and the rank-1 mw0r update)
#   y      = cellarc tail(m_h + r_h); epilogue: sigmoid gate, split 3 outputs.
# ----------------------------------------------------------------------------
def _cell_kernel(xc_ref, axes_ref, tabs_ref,
                 w0xc, b0xc, qwm, qbm, wqf, bqf,
                 waxbd, awm, abm, awlx, ablx, awly, ably,
                 wr, mwm, mbm, mwl, mbl,
                 efc1_ref, efc2_ref, efce_ref,
                 h0s_ref, pk_ref,
                 *, num_luts, lut_sz, dup, q_nmid, a_nmid, m_nmid, h1, h2):
    H = HIDDEN
    tm = xc_ref.shape[0]
    SS = lut_sz * lut_sz

    xc = xc_ref[...]          # (tm, dxc)            bf16
    axes = axes_ref[...]      # (tm, num_luts*(1+2*lut_sz)) bf16
    tabs = tabs_ref[...]      # (tm, num_luts*SS)    f32

    # fused first layer over xc -> [lut_query h0 | cellarc_msg h0 (xc part)]
    h_both = jnp.dot(xc, w0xc[...], preferred_element_type=jnp.float32) + b0xc[...]
    q_h = h_both[:, :H]
    m_h = h_both[:, H:]

    # lut_query mids, last layer pre-composed with attention-first-layer q part (+ab0)
    hq = _mlp_tail(q_h, qwm, qbm, wqf, bqf, q_nmid)          # (tm, nk*H) f32

    # attention first layer, axis part, all LUTs at once (block-diagonal weight)
    ax_h = jnp.dot(axes, waxbd[...], preferred_element_type=jnp.float32)   # (tm, num_luts*H)

    # assemble all nk = num_luts*dup attention pre-activations, row-stacked in VMEM
    for l in range(num_luts):
        axis_l = ax_h[:, l * H:(l + 1) * H]
        for d in range(dup):
            k = l * dup + d
            h0s_ref[k * tm:(k + 1) * tm, :] = hq[:, k * H:(k + 1) * H] + axis_l

    # batched attention mids + expanded last layers (weights shared across the nk copies)
    h = h0s_ref[...]                                          # (nk*tm, H) f32
    for li in range(a_nmid):
        h = _leaky(h)
        h = jnp.dot(h.astype(jnp.bfloat16), awm[li],
                    preferred_element_type=jnp.float32) + abm[li]
    hb = _leaky(h).astype(jnp.bfloat16)
    p_ax = jnp.dot(hb, awlx[...], preferred_element_type=jnp.float32) + ablx[...]  # (nk*tm, SS)
    p_ay = jnp.dot(hb, awly[...], preferred_element_type=jnp.float32) + ably[...]
    prod = p_ax * p_ay        # lane m = i*lut_sz + j -> ax_i * ay_j

    # multiply by the flattened LUT tables and lane-pack into (tm, nk*SS)
    for l in range(num_luts):
        tab_l = tabs[:, l * SS:(l + 1) * SS]
        for d in range(dup):
            k = l * dup + d
            pk_ref[:, k * SS:(k + 1) * SS] = prod[k * tm:(k + 1) * tm, :] * tab_l

    # LUT results -> cellarc_msg first layer: one MXU matmul replaces 8 lane
    # reductions + 8 rank-1 broadcast updates.
    r_h = jnp.dot(pk_ref[...].astype(jnp.bfloat16), wr[...],
                  preferred_element_type=jnp.float32)         # (tm, H)

    # cellarc_msg tail + fused gating epilogue
    y = _mlp_tail(m_h + r_h, mwm, mbm, mwl, mbl, m_nmid)      # (tm, 1+h1+h2+out_cef)
    kg = jax.nn.sigmoid(y[:, 0:1])
    efc1_ref[...] = y[:, 1:1 + h1] * kg
    efc2_ref[...] = y[:, 1 + h1:1 + h1 + h2] * kg
    efce_ref[...] = y[:, 1 + h1 + h2:]


def run_cell_fused(xc, axes, tabs, cp, tm_max=TM_CELL):
    nrows = xc.shape[0]
    xck = _pad_rows_min(xc.astype(jnp.bfloat16))
    axk = _pad_rows_min(axes.astype(jnp.bfloat16))
    tbk = _pad_rows_min(tabs)
    rows, dxc = xck.shape
    A, T = axk.shape[1], tbk.shape[1]
    num_luts, lut_sz, dup = cp["num_luts"], cp["lut_sz"], cp["dup"]
    h1, h2, out_cef = cp["h1"], cp["h2"], cp["out_cef"]
    nk = num_luts * dup
    SS = lut_sz * lut_sz

    tm = _row_tiling(rows, tm_max)
    grid = pl.cdiv(rows, tm)

    w_args = (cp["w0xc"], cp["b0xc"], cp["qwm"], cp["qbm"], cp["wqf"], cp["bqf"],
              cp["waxbd"], cp["awm"], cp["abm"],
              cp["awlx"], cp["ablx"], cp["awly"], cp["ably"],
              cp["wr"], cp["mwm"], cp["mbm"], cp["mwl"], cp["mbl"])

    efc1, efc2, efce = pl.pallas_call(
        functools.partial(_cell_kernel,
                          num_luts=num_luts, lut_sz=lut_sz, dup=dup,
                          q_nmid=cp["q_nmid"], a_nmid=cp["a_nmid"], m_nmid=cp["m_nmid"],
                          h1=h1, h2=h2),
        out_shape=(jax.ShapeDtypeStruct((rows, h1), jnp.float32),
                   jax.ShapeDtypeStruct((rows, h2), jnp.float32),
                   jax.ShapeDtypeStruct((rows, out_cef), jnp.float32)),
        grid_spec=pltpu.PrefetchScalarGridSpec(
            num_scalar_prefetch=0,
            grid=(grid,),
            in_specs=[pl.BlockSpec((tm, dxc), lambda i: (i, 0)),
                      pl.BlockSpec((tm, A), lambda i: (i, 0)),
                      pl.BlockSpec((tm, T), lambda i: (i, 0))]
                     + [_const_spec(a) for a in w_args],
            out_specs=[pl.BlockSpec((tm, h1), lambda i: (i, 0)),
                       pl.BlockSpec((tm, h2), lambda i: (i, 0)),
                       pl.BlockSpec((tm, out_cef), lambda i: (i, 0))],
            scratch_shapes=[pltpu.VMEM((nk * tm, HIDDEN), jnp.float32),
                            pltpu.VMEM((tm, nk * SS), jnp.float32)],
        ),
        compiler_params=pltpu.CompilerParams(
            dimension_semantics=("parallel",),
            vmem_limit_bytes=VMEM_LIMIT),
    )(xck, axk, tbk, *w_args)
    return efc1[:nrows], efc2[:nrows], efce[:nrows]


# ----------------------------------------------------------------------------
# Parameters (deterministic, PyTorch-Linear-style uniform init) + kernel prep.
# ----------------------------------------------------------------------------
def init_mlp(key, sizes):
    Ws, bs = [], []
    for i in range(1, len(sizes)):
        fan_in, fan_out = sizes[i - 1], sizes[i]
        key, k1, k2 = jax.random.split(key, 3)
        bound = 1.0 / (fan_in ** 0.5)
        Ws.append(jax.random.uniform(k1, (fan_in, fan_out), jnp.float32, -bound, bound))
        bs.append(jax.random.uniform(k2, (1, fan_out), jnp.float32, -bound, bound))
    return {"W": Ws, "b": bs}


def prep_mlp(p):
    Ws, bs = p["W"], p["b"]
    bf = jnp.bfloat16
    return dict(w0=Ws[0].astype(bf), b0=bs[0],
                wmid=jnp.stack(Ws[1:-1]).astype(bf), bmid=jnp.stack(bs[1:-1]),
                wlast=Ws[-1].astype(bf), blast=bs[-1],
                nmid=len(Ws) - 2)


def prep_cell(pq, pa, pm, cfg):
    """Host-side weight folding for the fused prop_cell kernel (all exact linear algebra)."""
    H = HIDDEN
    bf = jnp.bfloat16
    num_luts, lut_sz, dup = cfg["in_cell_num_luts"], cfg["in_cell_lut_sz"], cfg["lut_dup"]
    dxc = cfg["out_nf"] + 2 * cfg["in_nf"]
    nk = num_luts * dup
    S = 1 + 2 * lut_sz
    SS = lut_sz * lut_sz

    qW, qb = pq["W"], pq["b"]
    aW, ab = pa["W"], pa["b"]
    mW, mb = pm["W"], pm["b"]

    # fused first layer over xc: [lut_query | cellarc_msg(xc part)]
    w0xc = jnp.concatenate([qW[0], mW[0][:dxc]], axis=1).astype(bf)   # (dxc, 2H)
    b0xc = jnp.concatenate([qb[0], mb[0]], axis=1)                    # (1, 2H)

    # attention first layer split into q part / axis part
    aw0q, aw0x = aW[0][:2], aW[0][2:]                                 # (2,H), (S,H)

    # fold lut_query last layer with the attention first layer q part (+ ab0)
    wqf = jnp.concatenate([qW[-1][:, 2 * k:2 * k + 2] @ aw0q for k in range(nk)],
                          axis=1).astype(bf)                          # (H, nk*H)
    bqf = jnp.concatenate([qb[-1][:, 2 * k:2 * k + 2] @ aw0q + ab[0] for k in range(nk)],
                          axis=1)                                     # (1, nk*H)

    # block-diagonal axis weight: both LUTs' axis_h0 in one matmul
    waxbd = jnp.zeros((num_luts * S, num_luts * H), jnp.float32)
    for l in range(num_luts):
        waxbd = waxbd.at[l * S:(l + 1) * S, l * H:(l + 1) * H].set(aw0x)
    waxbd = waxbd.astype(bf)

    # attention last layer expanded to the flattened (i,j) table layout:
    # lane m = i*lut_sz + j  ->  ax column i (repeat), ay column j (tile)
    ax_cols = jnp.repeat(jnp.arange(lut_sz), lut_sz)
    ay_cols = jnp.tile(jnp.arange(lut_sz), lut_sz) + lut_sz
    awlx = aW[-1][:, ax_cols].astype(bf)
    ablx = ab[-1][:, ax_cols]
    awly = aW[-1][:, ay_cols].astype(bf)
    ably = ab[-1][:, ay_cols]

    # fold "sum over SS lanes" + rank-1 mw0r expansion into one (nk*SS, H) weight
    wr = jnp.repeat(mW[0][dxc:], SS, axis=0).astype(bf)               # (nk*SS, H)

    return dict(
        w0xc=w0xc, b0xc=b0xc,
        qwm=jnp.stack(qW[1:-1]).astype(bf), qbm=jnp.stack(qb[1:-1]),
        wqf=wqf, bqf=bqf,
        waxbd=waxbd,
        awm=jnp.stack(aW[1:-1]).astype(bf), abm=jnp.stack(ab[1:-1]),
        awlx=awlx, ablx=ablx, awly=awly, ably=ably,
        wr=wr,
        mwm=jnp.stack(mW[1:-1]).astype(bf), mbm=jnp.stack(mb[1:-1]),
        mwl=mW[-1].astype(bf), mbl=mb[-1],
        q_nmid=len(qW) - 2, a_nmid=len(aW) - 2, m_nmid=len(mW) - 2,
        num_luts=num_luts, lut_sz=lut_sz, dup=dup,
        h1=cfg["h1"], h2=cfg["h2"], out_cef=cfg["out_cef"],
    )


def prepare_params(raw, cfg):
    return dict(
        netprop=prep_mlp(raw["netprop"]),
        cellreduce=prep_mlp(raw["cellreduce"]),
        cell=prep_cell(raw["lut_query"], raw["lut_attention"], raw["cellarc_msg"], cfg),
    )


# ----------------------------------------------------------------------------
# SignalProp forward (groundtruth=True path).
# TODO(synk): the groundtruth=False iterative topological-level schedule
#             (alternating prop_net/prop_cell over ts['topo']) is not replicated;
#             it reuses exactly the same per-level message/reduce kernels below.
# ----------------------------------------------------------------------------
def signal_prop_forward(prepped, cfg, g, nf, n_ats, n_slew_log):
    N = nf.shape[0]
    out_nf = cfg["out_nf"]
    num_luts, lut_sz = cfg["in_cell_num_luts"], cfg["in_cell_lut_sz"]

    new_nf = jnp.zeros((N, out_nf), jnp.float32)

    # node_skip_level_o on PI nodes
    skip = jnp.concatenate([n_ats, n_slew_log], axis=1)
    new_nf = new_nf.at[g["pi_nodes"]].set(skip[g["pi_nodes"]])

    # ---- prop_net on input_nodes (edge_msg_net, groundtruth=True) ----
    src, dst = g["net_src"], g["net_dst"]
    xnet = jnp.concatenate([n_ats[src], n_slew_log[src], nf[src], nf[dst]],
                           axis=1).astype(jnp.bfloat16)
    efn = run_mlp(xnet, prepped["netprop"])
    net_sum = jax.ops.segment_sum(efn, dst, num_segments=N)     # fn.sum('efn','new_nf')
    new_nf = new_nf.at[g["input_nodes"]].set(net_sum[g["input_nodes"]])

    # ---- prop_cell on output_nodes_nonpi (fully fused edge_msg_cell) ----
    csrc, cdst, ef = g["cell_src"], g["cell_dst"], g["cell_ef"]
    axis_len = num_luts * (1 + 2 * lut_sz)
    tables_len = num_luts * lut_sz * lut_sz
    xc = jnp.concatenate([n_ats[csrc], n_slew_log[csrc], nf[csrc], nf[cdst]],
                         axis=1).astype(jnp.bfloat16)
    axes = ef[:, :axis_len].astype(jnp.bfloat16)
    tabs = ef[:, axis_len:axis_len + tables_len]

    efc1, efc2, efce = run_cell_fused(xc, axes, tabs, prepped["cell"])

    nfc1 = jax.ops.segment_sum(efc1, cdst, num_segments=N)      # fn.sum('efc1','nfc1')
    # guarded fn.max('efc2','nfc2'): nodes without cell in-edges get 0 (DGL semantics)
    deg = jax.ops.segment_sum(jnp.ones((efc2.shape[0],), jnp.float32), cdst, num_segments=N)
    nfc2 = jax.ops.segment_max(efc2, cdst, num_segments=N)
    nfc2 = jnp.where(deg[:, None] > 0, nfc2, 0.0)

    out_nodes = g["output_nodes_nonpi"]
    xr = jnp.concatenate([nf[out_nodes], nfc1[out_nodes], nfc2[out_nodes]],
                         axis=1).astype(jnp.bfloat16)
    new_o = run_mlp(xr, prepped["cellreduce"])
    new_nf = new_nf.at[out_nodes].set(new_o)

    return new_nf, efce


if __name__ == "__main__":
    key = jax.random.PRNGKey(0)

    in_nf, out_nf = 4, 8           # out_nf = dim(n_ats) + dim(n_slew_log) = 4 + 4
    num_luts, lut_sz, dup = 2, 4, 4
    out_cef, h1, h2 = 4, 32, 32
    cfg = dict(in_nf=in_nf, out_nf=out_nf, in_cell_num_luts=num_luts,
               in_cell_lut_sz=lut_sz, lut_dup=dup, out_cef=out_cef, h1=h1, h2=h2)

    kp = jax.random.split(key, 6)
    raw_params = {
        "netprop":       init_mlp(kp[0], (out_nf + 2 * in_nf, 64, 64, 64, 64, out_nf)),
        "lut_query":     init_mlp(kp[1], (out_nf + 2 * in_nf, 64, 64, 64, num_luts * dup * 2)),
        "lut_attention": init_mlp(kp[2], (2 + 1 + 2 * lut_sz, 64, 64, 64, 2 * lut_sz)),
        "cellarc_msg":   init_mlp(kp[3], (out_nf + 2 * in_nf + num_luts * dup, 64, 64, 64,
                                          1 + h1 + h2 + out_cef)),
        "cellreduce":    init_mlp(kp[4], (in_nf + h1 + h2, 64, 64, 64, out_nf)),
    }
    prepped = prepare_params(raw_params, cfg)

    # synthetic heterograph: 4 PI nodes -> (net_out) -> 4 cell-input nodes
    #                        4 cell-input nodes -> (cell_out) -> 4 cell-output nodes
    N = 12
    pi_nodes = jnp.array([0, 1, 2, 3], jnp.int32)
    input_nodes = jnp.array([4, 5, 6, 7], jnp.int32)
    output_nodes = jnp.array([8, 9, 10, 11], jnp.int32)
    net_src = jnp.array([0, 1, 1, 2, 2, 3, 3, 0], jnp.int32)
    net_dst = jnp.array([4, 4, 5, 5, 6, 6, 7, 7], jnp.int32)
    cell_src = jnp.array([4, 5, 5, 6, 6, 7, 7, 4], jnp.int32)
    cell_dst = jnp.array([8, 8, 9, 9, 10, 10, 11, 11], jnp.int32)
    E_cell = int(cell_src.shape[0])
    ef_width = num_luts * (1 + 2 * lut_sz) + num_luts * lut_sz * lut_sz   # 18 + 32 = 50

    kd = jax.random.split(kp[5], 4)
    nf = jax.random.normal(kd[0], (N, in_nf), jnp.float32)
    n_ats = jax.random.normal(kd[1], (N, out_nf // 2), jnp.float32)
    n_slew_log = jax.random.normal(kd[2], (N, out_nf // 2), jnp.float32)
    ef = jax.random.normal(kd[3], (E_cell, ef_width), jnp.float32)

    g = dict(pi_nodes=pi_nodes, input_nodes=input_nodes, output_nodes_nonpi=output_nodes,
             net_src=net_src, net_dst=net_dst,
             cell_src=cell_src, cell_dst=cell_dst, cell_ef=ef)

    new_nf, efce = signal_prop_forward(prepped, cfg, g, nf, n_ats, n_slew_log)
    jax.block_until_ready((new_nf, efce))
    assert new_nf.shape == (N, out_nf)
    assert efce.shape == (E_cell, out_cef)
    assert bool(jnp.isfinite(new_nf).all()) and bool(jnp.isfinite(efce).all())
    print("KERNEL_OK")
</pallas_src>

<mosaic_0001>
module attributes {stable_mosaic.version = 11 : i64} {
  func.func @_mlp_kernel(%arg0: i32, %arg1: memref<8x16xbf16, #tpu.memory_space<vmem>>, %arg2: memref<16x64xbf16, #tpu.memory_space<vmem>>, %arg3: memref<1x64xf32, #tpu.memory_space<vmem>>, %arg4: memref<3x64x64xbf16, #tpu.memory_space<vmem>>, %arg5: memref<3x1x64xf32, #tpu.memory_space<vmem>>, %arg6: memref<64x8xbf16, #tpu.memory_space<vmem>>, %arg7: memref<1x8xf32, #tpu.memory_space<vmem>>, %arg8: memref<8x8xf32, #tpu.memory_space<vmem>>) attributes {dimension_semantics = [#tpu.dimension_semantics<parallel>], iteration_bounds = array<i64: 1>, scalar_prefetch = 0 : i64, scratch_operands = 0 : i64, tpu.core_type = #tpu.core_type<tc>, window_params = [{transform_indices = @transform_0, window_bounds = array<i64: 8, 16>}, {pipeline_mode = #tpu.pipeline_mode<synchronous>, transform_indices = @transform_1, window_bounds = array<i64: 16, 64>}, {pipeline_mode = #tpu.pipeline_mode<synchronous>, transform_indices = @transform_2, window_bounds = array<i64: 1, 64>}, {pipeline_mode = #tpu.pipeline_mode<synchronous>, transform_indices = @transform_3, window_bounds = array<i64: 3, 64, 64>}, {pipeline_mode = #tpu.pipeline_mode<synchronous>, transform_indices = @transform_4, window_bounds = array<i64: 3, 1, 64>}, {pipeline_mode = #tpu.pipeline_mode<synchronous>, transform_indices = @transform_5, window_bounds = array<i64: 64, 8>}, {pipeline_mode = #tpu.pipeline_mode<synchronous>, transform_indices = @transform_6, window_bounds = array<i64: 1, 8>}, {transform_indices = @transform_7, window_bounds = array<i64: 8, 8>}]} {
    %c0 = arith.constant 0 : index
    %c0_0 = arith.constant 0 : index
    %0 = vector.load %arg1[%c0, %c0_0] : memref<8x16xbf16, #tpu.memory_space<vmem>>, vector<8x16xbf16>
    %c0_1 = arith.constant 0 : index
    %c0_2 = arith.constant 0 : index
    %1 = vector.load %arg2[%c0_1, %c0_2] : memref<16x64xbf16, #tpu.memory_space<vmem>>, vector<16x64xbf16>
    %cst = arith.constant dense<0.000000e+00> : vector<8x64xf32>
    %2 = tpu.matmul %0, %1, %cst {dimension_numbers = #tpu.dot_dimension_numbers<[1], [0], [0], [1], [0, 0, 1, 1], [], []>} : vector<8x16xbf16>, vector<16x64xbf16>, vector<8x64xf32> -> vector<8x64xf32>
    %c0_3 = arith.constant 0 : index
    %c0_4 = arith.constant 0 : index
    %3 = vector.load %arg3[%c0_3, %c0_4] : memref<1x64xf32, #tpu.memory_space<vmem>>, vector<1x64xf32>
    %4 = vector.broadcast %3 : vector<1x64xf32> to vector<8x64xf32>
    %5 = arith.addf %2, %4 : vector<8x64xf32>
    %cst_5 = arith.constant 2.000000e-01 : f32
    %6 = vector.broadcast %cst_5 : f32 to vector<8x64xf32>
    %7 = arith.mulf %6, %5 : vector<8x64xf32>
    %8 = arith.maximumf %5, %7 : vector<8x64xf32>
    %9 = arith.truncf %8 : vector<8x64xf32> to vector<8x64xbf16>
    %c0_6 = arith.constant 0 : index
    %c0_7 = arith.constant 0 : index
    %c0_8 = arith.constant 0 : index
    %10 = vector.load %arg4[%c0_6, %c0_7, %c0_8] : memref<3x64x64xbf16, #tpu.memory_space<vmem>>, vector<1x64x64xbf16>
    %11 = vector.shape_cast %10 : vector<1x64x64xbf16> to vector<64x64xbf16>
    %cst_9 = arith.constant dense<0.000000e+00> : vector<8x64xf32>
    %12 = tpu.matmul %9, %11, %cst_9 {dimension_numbers = #tpu.dot_dimension_numbers<[1], [0], [0], [1], [0, 0, 1, 1], [], []>} : vector<8x64xbf16>, vector<64x64xbf16>, vector<8x64xf32> -> vector<8x64xf32>
    %c0_10 = arith.constant 0 : index
    %c0_11 = arith.constant 0 : index
    %c0_12 = arith.constant 0 : index
    %13 = vector.load %arg5[%c0_10, %c0_11, %c0_12] : memref<3x1x64xf32, #tpu.memory_space<vmem>>, vector<1x1x64xf32>
    %14 = vector.shape_cast %13 : vector<1x1x64xf32> to vector<1x64xf32>
    %15 = vector.broadcast %14 : vector<1x64xf32> to vector<8x64xf32>
    %16 = arith.addf %12, %15 : vector<8x64xf32>
    %cst_13 = arith.constant 2.000000e-01 : f32
    %17 = vector.broadcast %cst_13 : f32 to vector<8x64xf32>
    %18 = arith.mulf %17, %16 : vector<8x64xf32>
    %19 = arith.maximumf %16, %18 : vector<8x64xf32>
    %20 = arith.truncf %19 : vector<8x64xf32> to vector<8x64xbf16>
    %c1 = arith.constant 1 : index
    %c0_14 = arith.constant 0 : index
    %c0_15 = arith.constant 0 : index
    %21 = vector.load %arg4[%c1, %c0_14, %c0_15] : memref<3x64x64xbf16, #tpu.memory_space<vmem>>, vector<1x64x64xbf16>
    %22 = vector.shape_cast %21 : vector<1x64x64xbf16> to vector<64x64xbf16>
    %cst_16 = arith.constant dense<0.000000e+00> : vector<8x64xf32>
    %23 = tpu.matmul %20, %22, %cst_16 {dimension_numbers = #tpu.dot_dimension_numbers<[1], [0], [0], [1], [0, 0, 1, 1], [], []>} : vector<8x64xbf16>, vector<64x64xbf16>, vector<8x64xf32> -> vector<8x64xf32>
    %c1_17 = arith.constant 1 : index
    %c0_18 = arith.constant 0 : index
    %c0_19 = arith.constant 0 : index
    %24 = vector.load %arg5[%c1_17, %c0_18, %c0_19] : memref<3x1x64xf32, #tpu.memory_space<vmem>>, vector<1x1x64xf32>
    %25 = vector.shape_cast %24 : vector<1x1x64xf32> to vector<1x64xf32>
    %26 = vector.broadcast %25 : vector<1x64xf32> to vector<8x64xf32>
    %27 = arith.addf %23, %26 : vector<8x64xf32>
    %cst_20 = arith.constant 2.000000e-01 : f32
    %28 = vector.broadcast %cst_20 : f32 to vector<8x64xf32>
    %29 = arith.mulf %28, %27 : vector<8x64xf32>
    %30 = arith.maximumf %27, %29 : vector<8x64xf32>
    %31 = arith.truncf %30 : vector<8x64xf32> to vector<8x64xbf16>
    %c2 = arith.constant 2 : index
    %c0_21 = arith.constant 0 : index
    %c0_22 = arith.constant 0 : index
    %32 = vector.load %arg4[%c2, %c0_21, %c0_22] : memref<3x64x64xbf16, #tpu.memory_space<vmem>>, vector<1x64x64xbf16>
    %33 = vector.shape_cast %32 : vector<1x64x64xbf16> to vector<64x64xbf16>
    %cst_23 = arith.constant dense<0.000000e+00> : vector<8x64xf32>
    %34 = tpu.matmul %31, %33, %cst_23 {dimension_numbers = #tpu.dot_dimension_numbers<[1], [0], [0], [1], [0, 0, 1, 1], [], []>} : vector<8x64xbf16>, vector<64x64xbf16>, vector<8x64xf32> -> vector<8x64xf32>
    %c2_24 = arith.constant 2 : index
    %c0_25 = arith.constant 0 : index
    %c0_26 = arith.constant 0 : index
    %35 = vector.load %arg5[%c2_24, %c0_25, %c0_26] : memref<3x1x64xf32, #tpu.memory_space<vmem>>, vector<1x1x64xf32>
    %36 = vector.shape_cast %35 : vector<1x1x64xf32> to vector<1x64xf32>
    %37 = vector.broadcast %36 : vector<1x64xf32> to vector<8x64xf32>
    %38 = arith.addf %34, %37 : vector<8x64xf32>
    %cst_27 = arith.constant 2.000000e-01 : f32
    %39 = vector.broadcast %cst_27 : f32 to vector<8x64xf32>
    %40 = arith.mulf %39, %38 : vector<8x64xf32>
    %41 = arith.maximumf %38, %40 : vector<8x64xf32>
    %42 = arith.truncf %41 : vector<8x64xf32> to vector<8x64xbf16>
    %c0_28 = arith.constant 0 : index
    %c0_29 = arith.constant 0 : index
    %43 = vector.load %arg6[%c0_28, %c0_29] : memref<64x8xbf16, #tpu.memory_space<vmem>>, vector<64x8xbf16>
    %cst_30 = arith.constant dense<0.000000e+00> : vector<8x8xf32>
    %44 = tpu.matmul %42, %43, %cst_30 {dimension_numbers = #tpu.dot_dimension_numbers<[1], [0], [0], [1], [0, 0, 1, 1], [], []>} : vector<8x64xbf16>, vector<64x8xbf16>, vector<8x8xf32> -> vector<8x8xf32>
    %c0_31 = arith.constant 0 : index
    %c0_32 = arith.constant 0 : index
    %45 = vector.load %arg7[%c0_31, %c0_32] : memref<1x8xf32, #tpu.memory_space<vmem>>, vector<1x8xf32>
    %46 = vector.broadcast %45 : vector<1x8xf32> to vector<8x8xf32>
    %47 = arith.addf %44, %46 : vector<8x8xf32>
    %c0_33 = arith.constant 0 : index
    %c0_34 = arith.constant 0 : index
    %48 = vector.load %arg8[%c0_33, %c0_34] : memref<8x8xf32, #tpu.memory_space<vmem>>, vector<8x8xf32>
    tpu.vector_store %arg8[%c0_33, %c0_34], %47 {strides = array<i32>} : memref<8x8xf32, #tpu.memory_space<vmem>>, vector<8x8xf32>,
    return
  }
  func.func @transform_0(%arg0: i32) -> (i32, i32) {
    %c0_i32 = arith.constant 0 : i32
    %c0_i32_0 = arith.constant 0 : i32
    return %arg0, %c0_i32 : i32, i32
  }
  func.func @transform_1(%arg0: i32) -> (i32, i32) {
    %c0_i32 = arith.constant 0 : i32
    %c0_i32_0 = arith.constant 0 : i32
    %c0_i32_1 = arith.constant 0 : i32
    return %c0_i32, %c0_i32_0 : i32, i32
  }
  func.func @transform_2(%arg0: i32) -> (i32, i32) {
    %c0_i32 = arith.constant 0 : i32
    %c0_i32_0 = arith.constant 0 : i32
    %c0_i32_1 = arith.constant 0 : i32
    return %c0_i32, %c0_i32_0 : i32, i32
  }
  func.func @transform_3(%arg0: i32) -> (i32, i32, i32) {
    %c0_i32 = arith.constant 0 : i32
    %c0_i32_0 = arith.constant 0 : i32
    %c0_i32_1 = arith.constant 0 : i32
    %c0_i32_2 = arith.constant 0 : i32
    return %c0_i32, %c0_i32_0, %c0_i32_1 : i32, i32, i32
  }
  func.func @transform_4(%arg0: i32) -> (i32, i32, i32) {
    %c0_i32 = arith.constant 0 : i32
    %c0_i32_0 = arith.constant 0 : i32
    %c0_i32_1 = arith.constant 0 : i32
    %c0_i32_2 = arith.constant 0 : i32
    return %c0_i32, %c0_i32_0, %c0_i32_1 : i32, i32, i32
  }
  func.func @transform_5(%arg0: i32) -> (i32, i32) {
    %c0_i32 = arith.constant 0 : i32
    %c0_i32_0 = arith.constant 0 : i32
    %c0_i32_1 = arith.constant 0 : i32
    return %c0_i32, %c0_i32_0 : i32, i32
  }
  func.func @transform_6(%arg0: i32) -> (i32, i32) {
    %c0_i32 = arith.constant 0 : i32
    %c0_i32_0 = arith.constant 0 : i32
    %c0_i32_1 = arith.constant 0 : i32
    return %c0_i32, %c0_i32_0 : i32, i32
  }
  func.func @transform_7(%arg0: i32) -> (i32, i32) {
    %c0_i32 = arith.constant 0 : i32
    %c0_i32_0 = arith.constant 0 : i32
    return %arg0, %c0_i32 : i32, i32
  }
}

</mosaic_0001>

<llo_original>
// kernel: tpu_custom_call.1
$region0: #{tpu_custom_call.1}
  #allocation0 [shape = 'u32[]', space=smem, size = 0x4, offset = 0x4, fixed_abs, tag = 'smem constant byte address 0x4 - core index']
  #allocation1 [shape = 'u32[144,128]{1,0:T(1,128)}', space=vmem, size = 0x12000, scoped, tag = 'internal scratch']
  %s0 = inlined_call_operand.hbm [shape: bf16[8,16], index: 0, kind: input, shape index: {}]
  %s1 = inlined_call_operand.hbm [shape: bf16[16,64], index: 1, kind: input, shape index: {}]
  %s2 = inlined_call_operand.hbm [shape: f32[1,64], index: 2, kind: input, shape index: {}]
  %s3 = inlined_call_operand.hbm [shape: bf16[3,64,64], index: 3, kind: input, shape index: {}]
  %s4 = inlined_call_operand.hbm [shape: f32[3,1,64], index: 4, kind: input, shape index: {}]
  %s5 = inlined_call_operand.hbm [shape: bf16[64,8], index: 5, kind: input, shape index: {}]
  %s6 = inlined_call_operand.hbm [shape: f32[1,8], index: 6, kind: input, shape index: {}]
  %s7 = inlined_call_operand.hbm [shape: f32[8,8], index: 7, kind: output, shape index: {}]
  %s8 = sld [smem:[#allocation0]]
  $region66: #{tpu_custom_call.1} parent=0
    _
  %s10 = ssub.s32 1, %s8
  %s11 = scalar_select 0, %s10, %s8
  $region1: #{tpu_custom_call.1} parent=0
    #allocation2 [shape = 'u8[2048]{0}', space=vmem, size = 0x800, scoped, tag = 'input window, operand 0, single buffered']
    #allocation3 [shape = 's32[1]{0}', space=sflag, size = 0x4, scoped, tag = 'scoped memory for tpu_custom_call.1']
    #allocation4 [shape = 's32[1]{0}', space=sflag, size = 0x4, scoped, tag = 'scoped memory for tpu_custom_call.1']
    #allocation5 [shape = 'u8[4096]{0}', space=vmem, size = 0x1000, scoped, tag = 'input window, operand 1, single buffered']
    #allocation6 [shape = 's32[1]{0}', space=sflag, size = 0x4, scoped, tag = 'scoped memory for tpu_custom_call.1']
    #allocation7 [shape = 'u8[512]{0}', space=vmem, size = 0x400, scoped, tag = 'input window, operand 2, single buffered']
    #allocation8 [shape = 'u8[49152]{0}', space=vmem, size = 0xc000, scoped, tag = 'input window, operand 3, single buffered']
    #allocation9 [shape = 's32[1]{0}', space=sflag, size = 0x4, scoped, tag = 'scoped memory for tpu_custom_call.1']
    #allocation10 [shape = 'u8[1536]{0}', space=vmem, size = 0x800, scoped, tag = 'input window, operand 4, single buffered']
    #allocation11 [shape = 'u8[16384]{0}', space=vmem, size = 0x4000, scoped, tag = 'input window, operand 5, single buffered']
    #allocation12 [shape = 's32[1]{0}', space=sflag, size = 0x4, scoped, tag = 'scoped memory for tpu_custom_call.1']
    #allocation13 [shape = 'u8[512]{0}', space=vmem, size = 0x400, scoped, tag = 'input window, operand 6, single buffered']
    #allocation14 [shape = 'u8[4096]{0}', space=vmem, size = 0x1000, scoped, tag = 'output window, operand 0, single buffered']
    %12 = vsyncpa [#allocation3], 0
    %13 = vsyncpa [#allocation6], 0
    %14 = vsyncpa [#allocation9], 0
    %15 = vsyncpa [#allocation12], 0
    %16 = vsyncpa [#allocation4], 0
    // Predicated region
    $region2: #{tpu_custom_call.1} parent=1 // pred_check
      _
    $region3: #{tpu_custom_call.1} parent=1 // pred_check_branch
      %18 = sbr.rel (0) target = $region5
    $region4: #{tpu_custom_call.1} parent=1 // pred_region
      %s20 = ssub.s32 64, 64
      %21 = vsyncadd [#allocation3], %s20
      %s23 = sshll.u32 [#allocation2], 4
      %s24 = int_to_ptr.vmem [resolvable:$true] %s23
      %26 = dma.hbm_to_vmem [thread:$0]  %s0, 64, %s24, [#allocation3]
    $region5: #{tpu_custom_call.1} parent=1 // pred_fallthru
      _
    // Predicated region
    $region6: #{tpu_custom_call.1} parent=1 // pred_check
      _
    $region7: #{tpu_custom_call.1} parent=1 // pred_check_branch
      %28 = sbr.rel (0) target = $region9
    $region8: #{tpu_custom_call.1} parent=1 // pred_region
      %s30 = ssub.s32 128, 128
      %31 = vsyncadd [#allocation6], %s30
      %s32 = sshll.u32 [#allocation5], 4
      %s33 = int_to_ptr.vmem [resolvable:$true] %s32
      %38 = dma.hbm_to_vmem [thread:$0]  %s1, 128, %s33, [#allocation6], 64, 64, 4
    $region9: #{tpu_custom_call.1} parent=1 // pred_fallthru
      _
    // Predicated region
    $region10: #{tpu_custom_call.1} parent=1 // pred_check
      _
    $region11: #{tpu_custom_call.1} parent=1 // pred_check_branch
      %40 = sbr.rel (0) target = $region13
    $region12: #{tpu_custom_call.1} parent=1 // pred_region
      %s42 = ssub.s32 16, 16
      %43 = vsyncadd [#allocation6], %s42
      %s45 = sshll.u32 [#allocation7], 4
      %s46 = int_to_ptr.vmem [resolvable:$true] %s45
      %48 = dma.hbm_to_vmem [thread:$0]  %s2, 16, %s46, [#allocation6]
    $region13: #{tpu_custom_call.1} parent=1 // pred_fallthru
      _
    // Predicated region
    $region14: #{tpu_custom_call.1} parent=1 // pred_check
      _
    $region15: #{tpu_custom_call.1} parent=1 // pred_check_branch
      %50 = sbr.rel (0) target = $region17
    $region16: #{tpu_custom_call.1} parent=1 // pred_region
      %s52 = ssub.s32 1536, 1536
      %53 = vsyncadd [#allocation9], %s52
      %s54 = sshll.u32 [#allocation8], 4
      %s55 = int_to_ptr.vmem [resolvable:$true] %s54
      %60 = dma.hbm_to_vmem [thread:$0]  %s3, 1536, %s55, [#allocation9], 64, 64, 4
    $region17: #{tpu_custom_call.1} parent=1 // pred_fallthru
      _
    // Predicated region
    $region18: #{tpu_custom_call.1} parent=1 // pred_check
      _
    $region19: #{tpu_custom_call.1} parent=1 // pred_check_branch
      %62 = sbr.rel (0) target = $region21
    $region20: #{tpu_custom_call.1} parent=1 // pred_region
      %s64 = ssub.s32 48, 48
      %65 = vsyncadd [#allocation9], %s64
      %s66 = sshll.u32 [#allocation10], 4
      %s67 = int_to_ptr.vmem [resolvable:$true] %s66
      %72 = dma.hbm_to_vmem [thread:$0]  %s4, 48, %s67, [#allocation9], 16, 16, 1
    $region21: #{tpu_custom_call.1} parent=1 // pred_fallthru
      _
    // Predicated region
    $region22: #{tpu_custom_call.1} parent=1 // pred_check
      _
    $region23: #{tpu_custom_call.1} parent=1 // pred_check_branch
      %74 = sbr.rel (0) target = $region25
    $region24: #{tpu_custom_call.1} parent=1 // pred_region
      %s76 = ssub.s32 512, 512
      %77 = vsyncadd [#allocation12], %s76
      %s78 = sshll.u32 [#allocation11], 4
      %s79 = int_to_ptr.vmem [resolvable:$true] %s78
      %84 = dma.hbm_to_vmem [thread:$0]  %s5, 512, %s79, [#allocation12], 64, 64, 4
    $region25: #{tpu_custom_call.1} parent=1 // pred_fallthru
      _
    // Predicated region
    $region26: #{tpu_custom_call.1} parent=1 // pred_check
      _
    $region27: #{tpu_custom_call.1} parent=1 // pred_check_branch
      %86 = sbr.rel (0) target = $region29
    $region28: #{tpu_custom_call.1} parent=1 // pred_region
      %s88 = ssub.s32 16, 16
      %89 = vsyncadd [#allocation12], %s88
      %s91 = sshll.u32 [#allocation13], 4
      %s92 = int_to_ptr.vmem [resolvable:$true] %s91
      %94 = dma.hbm_to_vmem [thread:$0]  %s6, 16, %s92, [#allocation12]
    $region29: #{tpu_custom_call.1} parent=1 // pred_fallthru
      _
    // Predicated region
    $region30: #{tpu_custom_call.1} parent=1 // pred_check
      _
    $region31: #{tpu_custom_call.1} parent=1 // pred_check_branch
      %96 = sbr.rel (0) target = $region33
    $region32: #{tpu_custom_call.1} parent=1 // pred_region
      %97 = dma.done [#allocation3], 64
    $region33: #{tpu_custom_call.1} parent=1 // pred_fallthru
      _
    // Predicated region
    $region34: #{tpu_custom_call.1} parent=1 // pred_check
      _
    $region35: #{tpu_custom_call.1} parent=1 // pred_check_branch
      %99 = sbr.rel (0) target = $region37
    $region36: #{tpu_custom_call.1} parent=1 // pred_region
      %100 = dma.done [#allocation6], 128
    $region37: #{tpu_custom_call.1} parent=1 // pred_fallthru
      _
    // Predicated region
    $region38: #{tpu_custom_call.1} parent=1 // pred_check
      _
    $region39: #{tpu_custom_call.1} parent=1 // pred_check_branch
      %102 = sbr.rel (0) target = $region41
    $region40: #{tpu_custom_call.1} parent=1 // pred_region
      %103 = dma.done [#allocation6], 16
    $region41: #{tpu_custom_call.1} parent=1 // pred_fallthru
      _
    // Predicated region
    $region42: #{tpu_custom_call.1} parent=1 // pred_check
      _
    $region43: #{tpu_custom_call.1} parent=1 // pred_check_branch
      %105 = sbr.rel (0) target = $region45
    $region44: #{tpu_custom_call.1} parent=1 // pred_region
      %106 = dma.done [#allocation9], 1536
    $region45: #{tpu_custom_call.1} parent=1 // pred_fallthru
      _
    // Predicated region
    $region46: #{tpu_custom_call.1} parent=1 // pred_check
      _
    $region47: #{tpu_custom_call.1} parent=1 // pred_check_branch
      %108 = sbr.rel (0) target = $region49
    $region48: #{tpu_custom_call.1} parent=1 // pred_region
      %109 = dma.done [#allocation9], 48
    $region49: #{tpu_custom_call.1} parent=1 // pred_fallthru
      _
    // Predicated region
    $region50: #{tpu_custom_call.1} parent=1 // pred_check
      _
    $region51: #{tpu_custom_call.1} parent=1 // pred_check_branch
      %111 = sbr.rel (0) target = $region53
    $region52: #{tpu_custom_call.1} parent=1 // pred_region
      %112 = dma.done [#allocation12], 512
    $region53: #{tpu_custom_call.1} parent=1 // pred_fallthru
      _
    // Predicated region
    $region54: #{tpu_custom_call.1} parent=1 // pred_check
      _
    $region55: #{tpu_custom_call.1} parent=1 // pred_check_branch
      %114 = sbr.rel (0) target = $region57
    $region56: #{tpu_custom_call.1} parent=1 // pred_region
      %115 = dma.done [#allocation12], 16
    $region57: #{tpu_custom_call.1} parent=1 // pred_fallthru
      _
    %v117 = vld [vmem:[#allocation2] sm:$0xf]
    %v118 = vld [vmem:[#allocation5] sm:$0xf]
    %v119 = vld [vmem:[#allocation5 + $0x4] sm:$0xf]
    %v120 = vld [vmem:[#allocation7] sm:$0x1]
    %v122 = vlaneseq
    %v123 = vshrl.u32 %v122, 7
    %v124 = vsub.s32 0, %v123
    %v125 = vrot.slane %v120, %v124
    %v129 = vunpack.c.l.b16 %v118
    %v130 = vunpack.c.l.b16 %v119
    %v131 = vpack.c.b16 %v130, %v129
    %vm133 = vcmask 130048
    %v135 = vsel %vm133, %v117, 0
    %137 = vmatprep.subr.bf16.mxu0 0
    %138 = vmatpush1.bf16.msra.mxu0 %v131
    %139 = vmatprep.subr.bf16.mxu0 0
    %140 = vmatpush1.bf16.msra.mxu0 0
    %141 = vmatprep.subr.bf16.mxu0 0
    %142 = vmatpush1.bf16.msra.mxu0 0
    %143 = vmatprep.subr.bf16.mxu0 0
    %144 = vmatpush1.bf16.msra.mxu0 0
    %145 = vmatprep.subr.bf16.mxu0 0
    %146 = vmatpush1.bf16.msra.mxu0 0
    %147 = vmatprep.subr.bf16.mxu0 0
    %148 = vmatpush1.bf16.msra.mxu0 0
    %149 = vmatprep.subr.bf16.mxu0 0
    %150 = vmatpush1.bf16.msra.mxu0 0
    %151 = vmatprep.subr.bf16.mxu0 0
    %152 = vmatpush1.bf16.msra.mxu0 0
    %153 = vmatprep.subr.bf16.mxu0 0
    %154 = vmatpush1.bf16.msra.mxu0 0
    %155 = vmatprep.subr.bf16.mxu0 0
    %156 = vmatpush1.bf16.msra.mxu0 0
    %157 = vmatprep.subr.bf16.mxu0 0
    %158 = vmatpush1.bf16.msra.mxu0 0
    %159 = vmatprep.subr.bf16.mxu0 0
    %160 = vmatpush1.bf16.msra.mxu0 0
    %161 = vmatprep.subr.bf16.mxu0 0
    %162 = vmatpush1.bf16.msra.mxu0 0
    %163 = vmatprep.subr.bf16.mxu0 0
    %164 = vmatpush1.bf16.msra.mxu0 0
    %165 = vmatprep.subr.bf16.mxu0 0
    %166 = vmatpush1.bf16.msra.mxu0 0
    %167 = vmatprep.subr.bf16.mxu0 0
    %168 = vmatpush1.bf16.msra.mxu0 0
    %169 = vmatprep.mubr.bf16.mxu0 0
    %170 = vmatmul.mubr.bf16.gmra.mrb[0].mxu0 %v135
    %v171 = vpop.f32.mrb[0].mxu0
    %v172 = vadd.f32 %v125, %v171
    %v173 = vpop.f32.mrb[0].mxu0
    %v174 = vpop.f32.mrb[0].mxu0
    %v175 = vpop.f32.mrb[0].mxu0
    %176 = vdwg.mxu0
    %v177 = vmul.f32 %v172, 0.2
    %v178 = vmax.f32 %v172, %v177
    %v179 = vpack.c.bf16 %v178, %v178
    %v180 = vld [vmem:[#allocation8] sm:$0xf]
    %v181 = vld [vmem:[#allocation8 + $0x4] sm:$0xf]
    %v182 = vld [vmem:[#allocation8 + $0x8] sm:$0xf]
    %v183 = vld [vmem:[#allocation8 + $0xc] sm:$0xf]
    %v184 = vld [vmem:[#allocation8 + $0x10] sm:$0xf]
    %v185 = vld [vmem:[#allocation8 + $0x14] sm:$0xf]
    %v186 = vld [vmem:[#allocation8 + $0x18] sm:$0xf]
    %v187 = vld [vmem:[#allocation8 + $0x1c] sm:$0xf]
    %v188 = vld [vmem:[#allocation10] sm:$0x1]
    %v190 = vlaneseq
    %v191 = vshrl.u32 %v190, 7
    %v192 = vsub.s32 0, %v191
    %v193 = vrot.slane %v188, %v192
    %v203 = vunpack.c.l.b16 %v180
    %v204 = vunpack.c.l.b16 %v181
    %v205 = vunpack.c.l.b16 %v182
    %v206 = vunpack.c.l.b16 %v183
    %v207 = vunpack.c.l.b16 %v184
    %v208 = vunpack.c.l.b16 %v185
    %v209 = vunpack.c.l.b16 %v186
    %v210 = vunpack.c.l.b16 %v187
    %v211 = vpack.c.b16 %v204, %v203
    %v212 = vpack.c.b16 %v206, %v205
    %v213 = vpack.c.b16 %v208, %v207
    %v214 = vpack.c.b16 %v210, %v209
    %vm219 = vcmask 523264
    %v221 = vsel %vm219, %v179, 0
    %223 = vmatprep.subr.bf16.mxu0 0
    %224 = vmatpush1.bf16.msra.mxu0 %v211
    %225 = vmatprep.subr.bf16.mxu0 0
    %226 = vmatpush1.bf16.msra.mxu0 %v212
    %227 = vmatprep.subr.bf16.mxu0 0
    %228 = vmatpush1.bf16.msra.mxu0 %v213
    %229 = vmatprep.subr.bf16.mxu0 0
    %230 = vmatpush1.bf16.msra.mxu0 %v214
    %231 = vmatprep.subr.bf16.mxu0 0
    %232 = vmatpush1.bf16.msra.mxu0 0
    %233 = vmatprep.subr.bf16.mxu0 0
    %234 = vmatpush1.bf16.msra.mxu0 0
    %235 = vmatprep.subr.bf16.mxu0 0
    %236 = vmatpush1.bf16.msra.mxu0 0
    %237 = vmatprep.subr.bf16.mxu0 0
    %238 = vmatpush1.bf16.msra.mxu0 0
    %239 = vmatprep.subr.bf16.mxu0 0
    %240 = vmatpush1.bf16.msra.mxu0 0
    %241 = vmatprep.subr.bf16.mxu0 0
    %242 = vmatpush1.bf16.msra.mxu0 0
    %243 = vmatprep.subr.bf16.mxu0 0
    %244 = vmatpush1.bf16.msra.mxu0 0
    %245 = vmatprep.subr.bf16.mxu0 0
    %246 = vmatpush1.bf16.msra.mxu0 0
    %247 = vmatprep.subr.bf16.mxu0 0
    %248 = vmatpush1.bf16.msra.mxu0 0
    %249 = vmatprep.subr.bf16.mxu0 0
    %250 = vmatpush1.bf16.msra.mxu0 0
    %251 = vmatprep.subr.bf16.mxu0 0
    %252 = vmatpush1.bf16.msra.mxu0 0
    %253 = vmatprep.subr.bf16.mxu0 0
    %254 = vmatpush1.bf16.msra.mxu0 0
    %255 = vmatprep.mubr.bf16.mxu0 0
    %256 = vmatmul.mubr.bf16.gmra.mrb[0].mxu0 %v221
    %v257 = vpop.f32.mrb[0].mxu0
    %v258 = vadd.f32 %v193, %v257
    %v259 = vpop.f32.mrb[0].mxu0
    %v260 = vpop.f32.mrb[0].mxu0
    %v261 = vpop.f32.mrb[0].mxu0
    %262 = vdwg.mxu0
    %v263 = vmul.f32 %v258, 0.2
    %v264 = vmax.f32 %v258, %v263
    %v265 = vpack.c.bf16 %v264, %v264
    %s266 = scalar_lea.vmem [#allocation8], 32
    %v267 = vld [vmem:[%s266] sm:$0xf]
    %v268 = vld [vmem:[%s266 + $0x4] sm:$0xf]
    %v269 = vld [vmem:[%s266 + $0x8] sm:$0xf]
    %v270 = vld [vmem:[%s266 + $0xc] sm:$0xf]
    %v271 = vld [vmem:[%s266 + $0x10] sm:$0xf]
    %v272 = vld [vmem:[%s266 + $0x14] sm:$0xf]
    %v273 = vld [vmem:[%s266 + $0x18] sm:$0xf]
    %v274 = vld [vmem:[%s266 + $0x1c] sm:$0xf]
    %s275 = scalar_lea.vmem [#allocation10], 1
    %v276 = vld [vmem:[%s275] sm:$0x1]
    %v278 = vlaneseq
    %v279 = vshrl.u32 %v278, 7
    %v280 = vsub.s32 0, %v279
    %v281 = vrot.slane %v276, %v280
    %v291 = vunpack.c.l.b16 %v267
    %v292 = vunpack.c.l.b16 %v268
    %v293 = vunpack.c.l.b16 %v269
    %v294 = vunpack.c.l.b16 %v270
    %v295 = vunpack.c.l.b16 %v271
    %v296 = vunpack.c.l.b16 %v272
    %v297 = vunpack.c.l.b16 %v273
    %v298 = vunpack.c.l.b16 %v274
    %v299 = vpack.c.b16 %v292, %v291
    %v300 = vpack.c.b16 %v294, %v293
    %v301 = vpack.c.b16 %v296, %v295
    %v302 = vpack.c.b16 %v298, %v297
    %v308 = vsel %vm219, %v265, 0
    %310 = vmatprep.subr.bf16.mxu0 0
    %311 = vmatpush1.bf16.msra.mxu0 %v299
    %312 = vmatprep.subr.bf16.mxu0 0
    %313 = vmatpush1.bf16.msra.mxu0 %v300
    %314 = vmatprep.subr.bf16.mxu0 0
    %315 = vmatpush1.bf16.msra.mxu0 %v301
    %316 = vmatprep.subr.bf16.mxu0 0
    %317 = vmatpush1.bf16.msra.mxu0 %v302
    %318 = vmatprep.subr.bf16.mxu0 0
    %319 = vmatpush1.bf16.msra.mxu0 0
    %320 = vmatprep.subr.bf16.mxu0 0
    %321 = vmatpush1.bf16.msra.mxu0 0
    %322 = vmatprep.subr.bf16.mxu0 0
    %323 = vmatpush1.bf16.msra.mxu0 0
    %324 = vmatprep.subr.bf16.mxu0 0
    %325 = vmatpush1.bf16.msra.mxu0 0
    %326 = vmatprep.subr.bf16.mxu0 0
    %327 = vmatpush1.bf16.msra.mxu0 0
    %328 = vmatprep.subr.bf16.mxu0 0
    %329 = vmatpush1.bf16.msra.mxu0 0
    %330 = vmatprep.subr.bf16.mxu0 0
    %331 = vmatpush1.bf16.msra.mxu0 0
    %332 = vmatprep.subr.bf16.mxu0 0
    %333 = vmatpush1.bf16.msra.mxu0 0
    %334 = vmatprep.subr.bf16.mxu0 0
    %335 = vmatpush1.bf16.msra.mxu0 0
    %336 = vmatprep.subr.bf16.mxu0 0
    %337 = vmatpush1.bf16.msra.mxu0 0
    %338 = vmatprep.subr.bf16.mxu0 0
    %339 = vmatpush1.bf16.msra.mxu0 0
    %340 = vmatprep.subr.bf16.mxu0 0
    %341 = vmatpush1.bf16.msra.mxu0 0
    %342 = vmatprep.mubr.bf16.mxu0 0
    %343 = vmatmul.mubr.bf16.gmra.mrb[0].mxu0 %v308
    %v344 = vpop.f32.mrb[0].mxu0
    %v345 = vadd.f32 %v281, %v344
    %v346 = vpop.f32.mrb[0].mxu0
    %v347 = vpop.f32.mrb[0].mxu0
    %v348 = vpop.f32.mrb[0].mxu0
    %349 = vdwg.mxu0
    %v350 = vmul.f32 %v345, 0.2
    %v351 = vmax.f32 %v345, %v350
    %v352 = vpack.c.bf16 %v351, %v351
    %s353 = scalar_lea.vmem [#allocation8], 64
    %v354 = vld [vmem:[%s353] sm:$0xf]
    %v355 = vld [vmem:[%s353 + $0x4] sm:$0xf]
    %v356 = vld [vmem:[%s353 + $0x8] sm:$0xf]
    %v357 = vld [vmem:[%s353 + $0xc] sm:$0xf]
    %v358 = vld [vmem:[%s353 + $0x10] sm:$0xf]
    %v359 = vld [vmem:[%s353 + $0x14] sm:$0xf]
    %v360 = vld [vmem:[%s353 + $0x18] sm:$0xf]
    %v361 = vld [vmem:[%s353 + $0x1c] sm:$0xf]
    %s362 = scalar_lea.vmem [#allocation10], 2
    %v363 = vld [vmem:[%s362] sm:$0x1]
    %v365 = vlaneseq
    %v366 = vshrl.u32 %v365, 7
    %v367 = vsub.s32 0, %v366
    %v368 = vrot.slane %v363, %v367
    %v378 = vunpack.c.l.b16 %v354
    %v379 = vunpack.c.l.b16 %v355
    %v380 = vunpack.c.l.b16 %v356
    %v381 = vunpack.c.l.b16 %v357
    %v382 = vunpack.c.l.b16 %v358
    %v383 = vunpack.c.l.b16 %v359
    %v384 = vunpack.c.l.b16 %v360
    %v385 = vunpack.c.l.b16 %v361
    %v386 = vpack.c.b16 %v379, %v378
    %v387 = vpack.c.b16 %v381, %v380
    %v388 = vpack.c.b16 %v383, %v382
    %v389 = vpack.c.b16 %v385, %v384
    %v395 = vsel %vm219, %v352, 0
    %397 = vmatprep.subr.bf16.mxu0 0
    %398 = vmatpush1.bf16.msra.mxu0 %v386
    %399 = vmatprep.subr.bf16.mxu0 0
    %400 = vmatpush1.bf16.msra.mxu0 %v387
    %401 = vmatprep.subr.bf16.mxu0 0
    %402 = vmatpush1.bf16.msra.mxu0 %v388
    %403 = vmatprep.subr.bf16.mxu0 0
    %404 = vmatpush1.bf16.msra.mxu0 %v389
    %405 = vmatprep.subr.bf16.mxu0 0
    %406 = vmatpush1.bf16.msra.mxu0 0
    %407 = vmatprep.subr.bf16.mxu0 0
    %408 = vmatpush1.bf16.msra.mxu0 0
    %409 = vmatprep.subr.bf16.mxu0 0
    %410 = vmatpush1.bf16.msra.mxu0 0
    %411 = vmatprep.subr.bf16.mxu0 0
    %412 = vmatpush1.bf16.msra.mxu0 0
    %413 = vmatprep.subr.bf16.mxu0 0
    %414 = vmatpush1.bf16.msra.mxu0 0
    %415 = vmatprep.subr.bf16.mxu0 0
    %416 = vmatpush1.bf16.msra.mxu0 0
    %417 = vmatprep.subr.bf16.mxu0 0
    %418 = vmatpush1.bf16.msra.mxu0 0
    %419 = vmatprep.subr.bf16.mxu0 0
    %420 = vmatpush1.bf16.msra.mxu0 0
    %421 = vmatprep.subr.bf16.mxu0 0
    %422 = vmatpush1.bf16.msra.mxu0 0
    %423 = vmatprep.subr.bf16.mxu0 0
    %424 = vmatpush1.bf16.msra.mxu0 0
    %425 = vmatprep.subr.bf16.mxu0 0
    %426 = vmatpush1.bf16.msra.mxu0 0
    %427 = vmatprep.subr.bf16.mxu0 0
    %428 = vmatpush1.bf16.msra.mxu0 0
    %429 = vmatprep.mubr.bf16.mxu0 0
    %430 = vmatmul.mubr.bf16.gmra.mrb[0].mxu0 %v395
    %v431 = vpop.f32.mrb[0].mxu0
    %v432 = vadd.f32 %v368, %v431
    %v433 = vpop.f32.mrb[0].mxu0
    %v434 = vpop.f32.mrb[0].mxu0
    %v435 = vpop.f32.mrb[0].mxu0
    %436 = vdwg.mxu0
    %v437 = vmul.f32 %v432, 0.2
    %v438 = vmax.f32 %v432, %v437
    %v439 = vpack.c.bf16 %v438, %v438
    %v440 = vld [vmem:[#allocation11] sm:$0xf]
    %v441 = vld [vmem:[#allocation11 + $0x4] sm:$0xf]
    %v442 = vld [vmem:[#allocation11 + $0x8] sm:$0xf]
    %v443 = vld [vmem:[#allocation11 + $0xc] sm:$0xf]
    %v444 = vld [vmem:[#allocation11 + $0x10] sm:$0xf]
    %v445 = vld [vmem:[#allocation11 + $0x14] sm:$0xf]
    %v446 = vld [vmem:[#allocation11 + $0x18] sm:$0xf]
    %v447 = vld [vmem:[#allocation11 + $0x1c] sm:$0xf]
    %v448 = vld [vmem:[#allocation13] sm:$0x1]
    %v450 = vlaneseq
    %v451 = vshrl.u32 %v450, 7
    %v452 = vsub.s32 0, %v451
    %v453 = vrot.slane %v448, %v452
    %v463 = vunpack.c.l.b16 %v440
    %v464 = vunpack.c.l.b16 %v441
    %v465 = vunpack.c.l.b16 %v442
    %v466 = vunpack.c.l.b16 %v443
    %v467 = vunpack.c.l.b16 %v444
    %v468 = vunpack.c.l.b16 %v445
    %v469 = vunpack.c.l.b16 %v446
    %v470 = vunpack.c.l.b16 %v447
    %v471 = vpack.c.b16 %v464, %v463
    %v472 = vpack.c.b16 %v466, %v465
    %v473 = vpack.c.b16 %v468, %v467
    %v474 = vpack.c.b16 %v470, %v469
    %v480 = vsel %vm219, %v439, 0
    %482 = vmatprep.subr.bf16.mxu0 0
    %483 = vmatpush1.bf16.msra.mxu0 %v471
    %484 = vmatprep.subr.bf16.mxu0 0
    %485 = vmatpush1.bf16.msra.mxu0 %v472
    %486 = vmatprep.subr.bf16.mxu0 0
    %487 = vmatpush1.bf16.msra.mxu0 %v473
    %488 = vmatprep.subr.bf16.mxu0 0
    %489 = vmatpush1.bf16.msra.mxu0 %v474
    %490 = vmatprep.subr.bf16.mxu0 0
    %491 = vmatpush1.bf16.msra.mxu0 0
    %492 = vmatprep.subr.bf16.mxu0 0
    %493 = vmatpush1.bf16.msra.mxu0 0
    %494 = vmatprep.subr.bf16.mxu0 0
    %495 = vmatpush1.bf16.msra.mxu0 0
    %496 = vmatprep.subr.bf16.mxu0 0
    %497 = vmatpush1.bf16.msra.mxu0 0
    %498 = vmatprep.subr.bf16.mxu0 0
    %499 = vmatpush1.bf16.msra.mxu0 0
    %500 = vmatprep.subr.bf16.mxu0 0
    %501 = vmatpush1.bf16.msra.mxu0 0
    %502 = vmatprep.subr.bf16.mxu0 0
    %503 = vmatpush1.bf16.msra.mxu0 0
    %504 = vmatprep.subr.bf16.mxu0 0
    %505 = vmatpush1.bf16.msra.mxu0 0
    %506 = vmatprep.subr.bf16.mxu0 0
    %507 = vmatpush1.bf16.msra.mxu0 0
    %508 = vmatprep.subr.bf16.mxu0 0
    %509 = vmatpush1.bf16.msra.mxu0 0
    %510 = vmatprep.subr.bf16.mxu0 0
    %511 = vmatpush1.bf16.msra.mxu0 0
    %512 = vmatprep.subr.bf16.mxu0 0
    %513 = vmatpush1.bf16.msra.mxu0 0
    %514 = vmatprep.mubr.bf16.mxu0 0
    %515 = vmatmul.mubr.bf16.gmra.mrb[0].mxu0 %v480
    %v516 = vpop.f32.mrb[0].mxu0
    %v517 = vadd.f32 %v453, %v516
    %v518 = vpop.f32.mrb[0].mxu0
    %v519 = vpop.f32.mrb[0].mxu0
    %v520 = vpop.f32.mrb[0].mxu0
    %521 = vdwg.mxu0
    %vm522 = vcmask 64512
    %523 = vst.msk [vmem:[#allocation14] sm:$0xff] %vm522, %v517
    // Predicated region
    $region58: #{tpu_custom_call.1} parent=1 // pred_check
      _
    $region59: #{tpu_custom_call.1} parent=1 // pred_check_branch
      %525 = sbr.rel (0) target = $region61
    $region60: #{tpu_custom_call.1} parent=1 // pred_region
      %s527 = ssub.s32 128, 128
      %528 = vsyncadd [#allocation4], %s527
      %s530 = sshll.u32 [#allocation14], 4
      %s531 = int_to_ptr.vmem [resolvable:$true] %s530
      %533 = dma.vmem_to_hbm [thread:$0]  %s531, 128, %s7, [#allocation4]
    $region61: #{tpu_custom_call.1} parent=1 // pred_fallthru
      _
    // Predicated region
    $region62: #{tpu_custom_call.1} parent=1 // pred_check
      _
    $region63: #{tpu_custom_call.1} parent=1 // pred_check_branch
      %535 = sbr.rel (0) target = $region65
    $region64: #{tpu_custom_call.1} parent=1 // pred_region
      %536 = dma.done [#allocation4], 128
    $region65: #{tpu_custom_call.1} parent=1 // pred_fallthru
      _
    %537 = vsyncpa [#allocation3], 1
    %538 = vsyncpa [#allocation6], 1
    %539 = vsyncpa [#allocation9], 1
    %540 = vsyncpa [#allocation12], 1
    %541 = vsyncpa [#allocation4], 1

</llo_original>
